<compile_context>
chip_gen: v5e
topology: v5e:2x2
jax: 0.10.0
libtpu: 0.0.40
codegen_flags: <defaults>
</compile_context>

<pallas_src>
import jax
import jax.numpy as jnp
from jax.experimental import pallas as pl
from jax.experimental.pallas import tpu as pltpu

NUM_INPUTS = 32
H1, H2, H3, OUT = 256, 128, 64, 3
OUT_COLS = 8          # narrow padded output width (real logits in columns [:3])
TB_DEFAULT = 2048     # max batch tile (sweep 1024-2048); multiple of 8


def _round_up(n, m):
    return ((n + m - 1) // m) * m


def _choose_tb(batch, tb_max):
    tb_max = max(8, _round_up(tb_max, 8))
    if batch <= 256:
        # Tiny batch: one block covering the (8-rounded) batch.
        return max(8, min(tb_max, _round_up(batch, 8)))
    # Medium/large batch: ensure >= 2 grid steps so v7x can shard the
    # "parallel" batch axis across both TensorCores (no-op on 1-TC v5e/v6e).
    half = _round_up(pl.cdiv(batch, 2), 8)
    return max(8, min(tb_max, half))


def mlp_kernel(x_ref,
               w1_ref, b1_ref,
               w2_ref, b2_ref,
               w3_ref, b3_ref,
               w4_ref, b4_ref,
               o_ref):
    # x arrives f32; cast to bf16 in-kernel so the wrapper does not make an
    # extra cast/pad pass over the batch in HBM.  Weights bf16, biases f32,
    # accumulation f32.
    x = x_ref[...].astype(jnp.bfloat16)
    h1 = jnp.dot(x, w1_ref[...], preferred_element_type=jnp.float32) + b1_ref[...]
    h1 = jnp.maximum(h1, 0.0).astype(jnp.bfloat16)      # ReLU (dropout1 = id, eval)
    h2 = jnp.dot(h1, w2_ref[...], preferred_element_type=jnp.float32) + b2_ref[...]
    h2 = jnp.maximum(h2, 0.0).astype(jnp.bfloat16)      # ReLU (dropout2 = id, eval)
    h3 = jnp.dot(h2, w3_ref[...], preferred_element_type=jnp.float32) + b3_ref[...]
    h3 = jnp.maximum(h3, 0.0).astype(jnp.bfloat16)      # ReLU
    h4 = jnp.dot(h3, w4_ref[...], preferred_element_type=jnp.float32) + b4_ref[...]
    o_ref[...] = h4.astype(o_ref.dtype)


def net_forward(x, params, *, tb=TB_DEFAULT):
    """Mirrors Net.forward: x.reshape(-1, num_inputs) -> 4-layer MLP.

    x: any shape with total size divisible by NUM_INPUTS.
    params: ((w1,b1),(w2,b2),(w3,b3),(w4,b4)) with w_i shaped [in, out], f32.
    """
    (w1, b1), (w2, b2), (w3, b3), (w4, b4) = params

    x2d = x.reshape(-1, NUM_INPUTS).astype(jnp.float32)
    B = x2d.shape[0]

    tb = _choose_tb(B, tb)
    B_pad = _round_up(B, tb)
    if B_pad != B:
        # Tail pad only (rows are independent; padded rows are sliced off).
        x2d = jnp.pad(x2d, ((0, B_pad - B), (0, 0)))

    # bf16 weight operands for the MXU; biases stay f32 (post-accumulation add).
    w1b = w1.astype(jnp.bfloat16)
    w2b = w2.astype(jnp.bfloat16)
    w3b = w3.astype(jnp.bfloat16)
    # Final layer padded only 3 -> 8 columns so the output block's last dim
    # equals the full array width (tiny HBM writeback vs. a 128-lane f32 slab).
    w4p = jnp.zeros((H3, OUT_COLS), jnp.bfloat16).at[:, :OUT].set(
        w4.astype(jnp.bfloat16))
    b1f = b1.astype(jnp.float32)
    b2f = b2.astype(jnp.float32)
    b3f = b3.astype(jnp.float32)
    b4p = jnp.zeros((1, OUT_COLS), jnp.float32).at[:, :OUT].set(
        b4.astype(jnp.float32))

    grid = (B_pad // tb,)
    full = lambda shape: pl.BlockSpec(shape, lambda i: (0, 0))  # grid-invariant

    mac = NUM_INPUTS * H1 + H1 * H2 + H2 * H3 + H3 * OUT_COLS
    flops = 2 * B_pad * mac
    weight_bytes = 2 * mac + 4 * (H1 + H2 + H3 + OUT_COLS)
    bytes_accessed = B_pad * NUM_INPUTS * 4 + B_pad * OUT_COLS * 4 + weight_bytes

    out_padded = pl.pallas_call(
        mlp_kernel,
        out_shape=jax.ShapeDtypeStruct((B_pad, OUT_COLS), jnp.float32),
        grid_spec=pltpu.PrefetchScalarGridSpec(
            num_scalar_prefetch=0,
            grid=grid,
            in_specs=[
                pl.BlockSpec((tb, NUM_INPUTS), lambda i: (i, 0)),
                full((NUM_INPUTS, H1)), full((1, H1)),
                full((H1, H2)),         full((1, H2)),
                full((H2, H3)),         full((1, H3)),
                full((H3, OUT_COLS)),   full((1, OUT_COLS)),
            ],
            out_specs=pl.BlockSpec((tb, OUT_COLS), lambda i: (i, 0)),
        ),
        compiler_params=pltpu.CompilerParams(
            dimension_semantics=("parallel",),
            vmem_limit_bytes=32 * 1024 * 1024),
        cost_estimate=pl.CostEstimate(
            flops=flops, transcendentals=0, bytes_accessed=bytes_accessed),
    )(x2d, w1b, b1f, w2b, b2f, w3b, b3f, w4p, b4p)

    # Strip batch padding and the 3->8 lane padding of the final layer.
    return out_padded[:B, :OUT]


def init_params(key):
    """Deterministic init mimicking torch.nn.Linear defaults:
    U(-1/sqrt(fan_in), 1/sqrt(fan_in)) for both weight and bias."""
    def linear(k, fan_in, fan_out):
        kw, kb = jax.random.split(k)
        bound = 1.0 / jnp.sqrt(fan_in)
        w = jax.random.uniform(kw, (fan_in, fan_out), jnp.float32, -bound, bound)
        b = jax.random.uniform(kb, (1, fan_out), jnp.float32, -bound, bound)
        return w, b

    k1, k2, k3, k4 = jax.random.split(key, 4)
    return (
        linear(k1, NUM_INPUTS, H1),
        linear(k2, H1, H2),
        linear(k3, H2, H3),
        linear(k4, H3, OUT),
    )


def net_reference(x, params):
    """Pure-JAX reference mirroring the kernel's bf16-operand / f32-accumulate
    numerics (identity dropout = eval semantics)."""
    (w1, b1), (w2, b2), (w3, b3), (w4, b4) = params
    bf = jnp.bfloat16
    h = x.reshape(-1, NUM_INPUTS).astype(bf)
    h = jnp.maximum(jnp.dot(h, w1.astype(bf),
                            preferred_element_type=jnp.float32) + b1, 0.0).astype(bf)
    h = jnp.maximum(jnp.dot(h, w2.astype(bf),
                            preferred_element_type=jnp.float32) + b2, 0.0).astype(bf)
    h = jnp.maximum(jnp.dot(h, w3.astype(bf),
                            preferred_element_type=jnp.float32) + b3, 0.0).astype(bf)
    return jnp.dot(h, w4.astype(bf), preferred_element_type=jnp.float32) + b4


if __name__ == "__main__":
    key = jax.random.PRNGKey(0)
    kx, kx2, kp = jax.random.split(key, 3)
    params = init_params(kp)

    # Small shape implied by the module: (2, 4, 32) -> reshaped to (8, 32).
    x_small = jax.random.normal(kx, (2, 4, NUM_INPUTS), jnp.float32)
    out_small = jax.block_until_ready(net_forward(x_small, params))
    ref_small = net_reference(x_small, params)
    assert out_small.shape == (8, OUT)
    assert jnp.allclose(out_small, ref_small, atol=2e-2, rtol=2e-2)

    # Non-tile-multiple batch exercises tail padding and a 2-step parallel grid
    # (both TensorCores on v7x).
    x_large = jax.random.normal(kx2, (1000, NUM_INPUTS), jnp.float32)
    out_large = jax.block_until_ready(net_forward(x_large, params))
    ref_large = net_reference(x_large, params)
    assert out_large.shape == (1000, OUT)
    assert jnp.allclose(out_large, ref_large, atol=2e-2, rtol=2e-2)

    print("KERNEL_OK")
</pallas_src>

<mosaic_0001>
module attributes {stable_mosaic.version = 11 : i64} {
  func.func @mlp_kernel(%arg0: i32, %arg1: memref<8x32xf32, #tpu.memory_space<vmem>>, %arg2: memref<32x256xbf16, #tpu.memory_space<vmem>>, %arg3: memref<1x256xf32, #tpu.memory_space<vmem>>, %arg4: memref<256x128xbf16, #tpu.memory_space<vmem>>, %arg5: memref<1x128xf32, #tpu.memory_space<vmem>>, %arg6: memref<128x64xbf16, #tpu.memory_space<vmem>>, %arg7: memref<1x64xf32, #tpu.memory_space<vmem>>, %arg8: memref<64x8xbf16, #tpu.memory_space<vmem>>, %arg9: memref<1x8xf32, #tpu.memory_space<vmem>>, %arg10: memref<8x8xf32, #tpu.memory_space<vmem>>) attributes {dimension_semantics = [#tpu.dimension_semantics<parallel>], iteration_bounds = array<i64: 1>, scalar_prefetch = 0 : i64, scratch_operands = 0 : i64, tpu.core_type = #tpu.core_type<tc>, window_params = [{transform_indices = @transform_0, window_bounds = array<i64: 8, 32>}, {pipeline_mode = #tpu.pipeline_mode<synchronous>, transform_indices = @transform_1, window_bounds = array<i64: 32, 256>}, {pipeline_mode = #tpu.pipeline_mode<synchronous>, transform_indices = @transform_2, window_bounds = array<i64: 1, 256>}, {pipeline_mode = #tpu.pipeline_mode<synchronous>, transform_indices = @transform_3, window_bounds = array<i64: 256, 128>}, {pipeline_mode = #tpu.pipeline_mode<synchronous>, transform_indices = @transform_4, window_bounds = array<i64: 1, 128>}, {pipeline_mode = #tpu.pipeline_mode<synchronous>, transform_indices = @transform_5, window_bounds = array<i64: 128, 64>}, {pipeline_mode = #tpu.pipeline_mode<synchronous>, transform_indices = @transform_6, window_bounds = array<i64: 1, 64>}, {pipeline_mode = #tpu.pipeline_mode<synchronous>, transform_indices = @transform_7, window_bounds = array<i64: 64, 8>}, {pipeline_mode = #tpu.pipeline_mode<synchronous>, transform_indices = @transform_8, window_bounds = array<i64: 1, 8>}, {transform_indices = @transform_9, window_bounds = array<i64: 8, 8>}]} {
    %c0 = arith.constant 0 : index
    %c0_0 = arith.constant 0 : index
    %0 = vector.load %arg1[%c0, %c0_0] : memref<8x32xf32, #tpu.memory_space<vmem>>, vector<8x32xf32>
    %1 = arith.truncf %0 : vector<8x32xf32> to vector<8x32xbf16>
    %c0_1 = arith.constant 0 : index
    %c0_2 = arith.constant 0 : index
    %2 = vector.load %arg2[%c0_1, %c0_2] : memref<32x256xbf16, #tpu.memory_space<vmem>>, vector<32x256xbf16>
    %cst = arith.constant dense<0.000000e+00> : vector<8x256xf32>
    %3 = tpu.matmul %1, %2, %cst {dimension_numbers = #tpu.dot_dimension_numbers<[1], [0], [0], [1], [0, 0, 1, 1], [], []>} : vector<8x32xbf16>, vector<32x256xbf16>, vector<8x256xf32> -> vector<8x256xf32>
    %c0_3 = arith.constant 0 : index
    %c0_4 = arith.constant 0 : index
    %4 = vector.load %arg3[%c0_3, %c0_4] : memref<1x256xf32, #tpu.memory_space<vmem>>, vector<1x256xf32>
    %5 = vector.broadcast %4 : vector<1x256xf32> to vector<8x256xf32>
    %6 = arith.addf %3, %5 : vector<8x256xf32>
    %cst_5 = arith.constant 0.000000e+00 : f32
    %7 = vector.broadcast %cst_5 : f32 to vector<8x256xf32>
    %8 = arith.maximumf %6, %7 : vector<8x256xf32>
    %9 = arith.truncf %8 : vector<8x256xf32> to vector<8x256xbf16>
    %c0_6 = arith.constant 0 : index
    %c0_7 = arith.constant 0 : index
    %10 = vector.load %arg4[%c0_6, %c0_7] : memref<256x128xbf16, #tpu.memory_space<vmem>>, vector<256x128xbf16>
    %cst_8 = arith.constant dense<0.000000e+00> : vector<8x128xf32>
    %11 = tpu.matmul %9, %10, %cst_8 {dimension_numbers = #tpu.dot_dimension_numbers<[1], [0], [0], [1], [0, 0, 1, 1], [], []>} : vector<8x256xbf16>, vector<256x128xbf16>, vector<8x128xf32> -> vector<8x128xf32>
    %c0_9 = arith.constant 0 : index
    %c0_10 = arith.constant 0 : index
    %12 = vector.load %arg5[%c0_9, %c0_10] : memref<1x128xf32, #tpu.memory_space<vmem>>, vector<1x128xf32>
    %13 = vector.broadcast %12 : vector<1x128xf32> to vector<8x128xf32>
    %14 = arith.addf %11, %13 : vector<8x128xf32>
    %cst_11 = arith.constant 0.000000e+00 : f32
    %15 = vector.broadcast %cst_11 : f32 to vector<8x128xf32>
    %16 = arith.maximumf %14, %15 : vector<8x128xf32>
    %17 = arith.truncf %16 : vector<8x128xf32> to vector<8x128xbf16>
    %c0_12 = arith.constant 0 : index
    %c0_13 = arith.constant 0 : index
    %18 = vector.load %arg6[%c0_12, %c0_13] : memref<128x64xbf16, #tpu.memory_space<vmem>>, vector<128x64xbf16>
    %cst_14 = arith.constant dense<0.000000e+00> : vector<8x64xf32>
    %19 = tpu.matmul %17, %18, %cst_14 {dimension_numbers = #tpu.dot_dimension_numbers<[1], [0], [0], [1], [0, 0, 1, 1], [], []>} : vector<8x128xbf16>, vector<128x64xbf16>, vector<8x64xf32> -> vector<8x64xf32>
    %c0_15 = arith.constant 0 : index
    %c0_16 = arith.constant 0 : index
    %20 = vector.load %arg7[%c0_15, %c0_16] : memref<1x64xf32, #tpu.memory_space<vmem>>, vector<1x64xf32>
    %21 = vector.broadcast %20 : vector<1x64xf32> to vector<8x64xf32>
    %22 = arith.addf %19, %21 : vector<8x64xf32>
    %cst_17 = arith.constant 0.000000e+00 : f32
    %23 = vector.broadcast %cst_17 : f32 to vector<8x64xf32>
    %24 = arith.maximumf %22, %23 : vector<8x64xf32>
    %25 = arith.truncf %24 : vector<8x64xf32> to vector<8x64xbf16>
    %c0_18 = arith.constant 0 : index
    %c0_19 = arith.constant 0 : index
    %26 = vector.load %arg8[%c0_18, %c0_19] : memref<64x8xbf16, #tpu.memory_space<vmem>>, vector<64x8xbf16>
    %cst_20 = arith.constant dense<0.000000e+00> : vector<8x8xf32>
    %27 = tpu.matmul %25, %26, %cst_20 {dimension_numbers = #tpu.dot_dimension_numbers<[1], [0], [0], [1], [0, 0, 1, 1], [], []>} : vector<8x64xbf16>, vector<64x8xbf16>, vector<8x8xf32> -> vector<8x8xf32>
    %c0_21 = arith.constant 0 : index
    %c0_22 = arith.constant 0 : index
    %28 = vector.load %arg9[%c0_21, %c0_22] : memref<1x8xf32, #tpu.memory_space<vmem>>, vector<1x8xf32>
    %29 = vector.broadcast %28 : vector<1x8xf32> to vector<8x8xf32>
    %30 = arith.addf %27, %29 : vector<8x8xf32>
    %c0_23 = arith.constant 0 : index
    %c0_24 = arith.constant 0 : index
    %31 = vector.load %arg10[%c0_23, %c0_24] : memref<8x8xf32, #tpu.memory_space<vmem>>, vector<8x8xf32>
    tpu.vector_store %arg10[%c0_23, %c0_24], %30 {strides = array<i32>} : memref<8x8xf32, #tpu.memory_space<vmem>>, vector<8x8xf32>,
    return
  }
  func.func @transform_0(%arg0: i32) -> (i32, i32) {
    %c0_i32 = arith.constant 0 : i32
    %c0_i32_0 = arith.constant 0 : i32
    return %arg0, %c0_i32 : i32, i32
  }
  func.func @transform_1(%arg0: i32) -> (i32, i32) {
    %c0_i32 = arith.constant 0 : i32
    %c0_i32_0 = arith.constant 0 : i32
    %c0_i32_1 = arith.constant 0 : i32
    return %c0_i32, %c0_i32_0 : i32, i32
  }
  func.func @transform_2(%arg0: i32) -> (i32, i32) {
    %c0_i32 = arith.constant 0 : i32
    %c0_i32_0 = arith.constant 0 : i32
    %c0_i32_1 = arith.constant 0 : i32
    return %c0_i32, %c0_i32_0 : i32, i32
  }
  func.func @transform_3(%arg0: i32) -> (i32, i32) {
    %c0_i32 = arith.constant 0 : i32
    %c0_i32_0 = arith.constant 0 : i32
    %c0_i32_1 = arith.constant 0 : i32
    return %c0_i32, %c0_i32_0 : i32, i32
  }
  func.func @transform_4(%arg0: i32) -> (i32, i32) {
    %c0_i32 = arith.constant 0 : i32
    %c0_i32_0 = arith.constant 0 : i32
    %c0_i32_1 = arith.constant 0 : i32
    return %c0_i32, %c0_i32_0 : i32, i32
  }
  func.func @transform_5(%arg0: i32) -> (i32, i32) {
    %c0_i32 = arith.constant 0 : i32
    %c0_i32_0 = arith.constant 0 : i32
    %c0_i32_1 = arith.constant 0 : i32
    return %c0_i32, %c0_i32_0 : i32, i32
  }
  func.func @transform_6(%arg0: i32) -> (i32, i32) {
    %c0_i32 = arith.constant 0 : i32
    %c0_i32_0 = arith.constant 0 : i32
    %c0_i32_1 = arith.constant 0 : i32
    return %c0_i32, %c0_i32_0 : i32, i32
  }
  func.func @transform_7(%arg0: i32) -> (i32, i32) {
    %c0_i32 = arith.constant 0 : i32
    %c0_i32_0 = arith.constant 0 : i32
    %c0_i32_1 = arith.constant 0 : i32
    return %c0_i32, %c0_i32_0 : i32, i32
  }
  func.func @transform_8(%arg0: i32) -> (i32, i32) {
    %c0_i32 = arith.constant 0 : i32
    %c0_i32_0 = arith.constant 0 : i32
    %c0_i32_1 = arith.constant 0 : i32
    return %c0_i32, %c0_i32_0 : i32, i32
  }
  func.func @transform_9(%arg0: i32) -> (i32, i32) {
    %c0_i32 = arith.constant 0 : i32
    %c0_i32_0 = arith.constant 0 : i32
    return %arg0, %c0_i32 : i32, i32
  }
}

</mosaic_0001>

<llo_original>
// kernel: tpu_custom_call.1
$region0: #{tpu_custom_call.1}
  #allocation0 [shape = 'u32[]', space=smem, size = 0x4, offset = 0x4, fixed_abs, tag = 'smem constant byte address 0x4 - core index']
  #allocation1 [shape = 'u32[72,128]{1,0:T(1,128)}', space=vmem, size = 0x9000, scoped, tag = 'internal scratch']
  %s0 = inlined_call_operand.hbm [shape: f32[8,32], index: 0, kind: input, shape index: {}]
  %s1 = inlined_call_operand.hbm [shape: bf16[32,256], index: 1, kind: input, shape index: {}]
  %s2 = inlined_call_operand.vmem [shape: f32[1,256], index: 2, kind: input, shape index: {}]
  %s3 = inlined_call_operand.vmem [shape: bf16[256,128], index: 3, kind: input, shape index: {}]
  %s4 = inlined_call_operand.vmem [shape: f32[1,128], index: 4, kind: input, shape index: {}]
  %s5 = inlined_call_operand.vmem [shape: bf16[128,64], index: 5, kind: input, shape index: {}]
  %s6 = inlined_call_operand.vmem [shape: f32[1,64], index: 6, kind: input, shape index: {}]
  %s7 = inlined_call_operand.vmem [shape: bf16[64,8], index: 7, kind: input, shape index: {}]
  %s8 = inlined_call_operand.vmem [shape: f32[1,8], index: 8, kind: input, shape index: {}]
  %s9 = inlined_call_operand.hbm [shape: f32[8,8], index: 9, kind: output, shape index: {}]
  %s10 = sld [smem:[#allocation0]]
  $region54: #{tpu_custom_call.1} parent=0
    _
  %s12 = ssub.s32 1, %s10
  %s13 = scalar_select 0, %s12, %s10
  $region1: #{tpu_custom_call.1} parent=0
    #allocation2 [shape = 'u8[4096]{0}', space=vmem, size = 0x1000, scoped, tag = 'input window, operand 0, single buffered']
    #allocation3 [shape = 's32[1]{0}', space=sflag, size = 0x4, scoped, tag = 'scoped memory for tpu_custom_call.1']
    #allocation4 [shape = 's32[1]{0}', space=sflag, size = 0x4, scoped, tag = 'scoped memory for tpu_custom_call.1']
    #allocation5 [shape = 'u8[16384]{0}', space=vmem, size = 0x4000, scoped, tag = 'input window, operand 1, single buffered']
    #allocation6 [shape = 's32[1]{0}', space=sflag, size = 0x4, scoped, tag = 'scoped memory for tpu_custom_call.1']
    #allocation7 [shape = 'u8[4096]{0}', space=vmem, size = 0x1000, scoped, tag = 'output window, operand 0, single buffered']
    %14 = vsyncpa [#allocation3], 0
    %15 = vsyncpa [#allocation6], 0
    %16 = vsyncpa [#allocation4], 0
    // Predicated region
    $region2: #{tpu_custom_call.1} parent=1 // pred_check
      _
    $region3: #{tpu_custom_call.1} parent=1 // pred_check_branch
      %18 = sbr.rel (0) target = $region5
    $region4: #{tpu_custom_call.1} parent=1 // pred_region
      %20 = vsyncadd [#allocation3], 0
      %s22 = sshll.u32 %s0, 4
      %s23 = int_to_ptr.hbm [resolvable:$true] %s22
      %s24 = sshll.u32 [#allocation2], 4
      %s25 = int_to_ptr.vmem [resolvable:$true] %s24
      %27 = dma.hbm_to_vmem [thread:$0]  %s23, 128, %s25, [#allocation3]
    $region5: #{tpu_custom_call.1} parent=1 // pred_fallthru
      _
    // Predicated region
    $region6: #{tpu_custom_call.1} parent=1 // pred_check
      _
    $region7: #{tpu_custom_call.1} parent=1 // pred_check_branch
      %29 = sbr.rel (0) target = $region9
    $region8: #{tpu_custom_call.1} parent=1 // pred_region
      %31 = vsyncadd [#allocation6], 0
      %s32 = sshll.u32 %s1, 4
      %s33 = int_to_ptr.hbm [resolvable:$true] %s32
      %s34 = sshll.u32 [#allocation5], 4
      %s35 = int_to_ptr.vmem [resolvable:$true] %s34
      %40 = dma.hbm_to_vmem [thread:$0]  %s33, 512, %s35, [#allocation6], 128, 128, 8
    $region9: #{tpu_custom_call.1} parent=1 // pred_fallthru
      _
    // Predicated region
    $region10: #{tpu_custom_call.1} parent=1 // pred_check
      _
    $region11: #{tpu_custom_call.1} parent=1 // pred_check_branch
      %42 = sbr.rel (0) target = $region13
    $region12: #{tpu_custom_call.1} parent=1 // pred_region
      _
    $region13: #{tpu_custom_call.1} parent=1 // pred_fallthru
      _
    // Predicated region
    $region14: #{tpu_custom_call.1} parent=1 // pred_check
      _
    $region15: #{tpu_custom_call.1} parent=1 // pred_check_branch
      %44 = sbr.rel (0) target = $region17
    $region16: #{tpu_custom_call.1} parent=1 // pred_region
      _
    $region17: #{tpu_custom_call.1} parent=1 // pred_fallthru
      _
    // Predicated region
    $region18: #{tpu_custom_call.1} parent=1 // pred_check
      _
    $region19: #{tpu_custom_call.1} parent=1 // pred_check_branch
      %46 = sbr.rel (0) target = $region21
    $region20: #{tpu_custom_call.1} parent=1 // pred_region
      _
    $region21: #{tpu_custom_call.1} parent=1 // pred_fallthru
      _
    // Predicated region
    $region22: #{tpu_custom_call.1} parent=1 // pred_check
      _
    $region23: #{tpu_custom_call.1} parent=1 // pred_check_branch
      %48 = sbr.rel (0) target = $region25
    $region24: #{tpu_custom_call.1} parent=1 // pred_region
      _
    $region25: #{tpu_custom_call.1} parent=1 // pred_fallthru
      _
    // Predicated region
    $region26: #{tpu_custom_call.1} parent=1 // pred_check
      _
    $region27: #{tpu_custom_call.1} parent=1 // pred_check_branch
      %50 = sbr.rel (0) target = $region29
    $region28: #{tpu_custom_call.1} parent=1 // pred_region
      _
    $region29: #{tpu_custom_call.1} parent=1 // pred_fallthru
      _
    // Predicated region
    $region30: #{tpu_custom_call.1} parent=1 // pred_check
      _
    $region31: #{tpu_custom_call.1} parent=1 // pred_check_branch
      %52 = sbr.rel (0) target = $region33
    $region32: #{tpu_custom_call.1} parent=1 // pred_region
      _
    $region33: #{tpu_custom_call.1} parent=1 // pred_fallthru
      _
    // Predicated region
    $region34: #{tpu_custom_call.1} parent=1 // pred_check
      _
    $region35: #{tpu_custom_call.1} parent=1 // pred_check_branch
      %54 = sbr.rel (0) target = $region37
    $region36: #{tpu_custom_call.1} parent=1 // pred_region
      _
    $region37: #{tpu_custom_call.1} parent=1 // pred_fallthru
      _
    // Predicated region
    $region38: #{tpu_custom_call.1} parent=1 // pred_check
      _
    $region39: #{tpu_custom_call.1} parent=1 // pred_check_branch
      %56 = sbr.rel (0) target = $region41
    $region40: #{tpu_custom_call.1} parent=1 // pred_region
      %58 = dma.done [#allocation3], 128
    $region41: #{tpu_custom_call.1} parent=1 // pred_fallthru
      _
    // Predicated region
    $region42: #{tpu_custom_call.1} parent=1 // pred_check
      _
    $region43: #{tpu_custom_call.1} parent=1 // pred_check_branch
      %60 = sbr.rel (0) target = $region45
    $region44: #{tpu_custom_call.1} parent=1 // pred_region
      %62 = dma.done [#allocation6], 512
    $region45: #{tpu_custom_call.1} parent=1 // pred_fallthru
      _
    %v64 = vld [vmem:[#allocation2] sm:$0xff]
    %v65 = vpack.c.bf16 %v64, %v64
    %v66 = vld [vmem:[#allocation5] sm:$0xff]
    %v67 = vld [vmem:[#allocation5 + $0x8] sm:$0xff]
    %v68 = vld [vmem:[#allocation5 + $0x10] sm:$0xff]
    %v69 = vld [vmem:[#allocation5 + $0x18] sm:$0xff]
    %v70 = vld [vmem:[%s2] sm:$0x3]
    %v72 = vperm.slane %v70, 0
    %v73 = vperm.slane %v70, 1
    %v80 = vunpack.c.l.b16 %v66
    %v81 = vunpack.c.h.b16 %v66
    %v82 = vunpack.c.l.b16 %v67
    %v83 = vunpack.c.h.b16 %v67
    %v84 = vunpack.c.l.b16 %v68
    %v85 = vunpack.c.h.b16 %v68
    %v86 = vunpack.c.l.b16 %v69
    %v87 = vunpack.c.h.b16 %v69
    %v88 = vpack.c.b16 %v82, %v80
    %v89 = vpack.c.b16 %v83, %v81
    %v90 = vpack.c.b16 %v86, %v84
    %v91 = vpack.c.b16 %v87, %v85
    %vm96 = vcmask 261120
    %v98 = vsel %vm96, %v65, 0
    %100 = vmatpush.bf16.msra.mxu0 0
    %101 = vmatpush.bf16.msra.mxu0 0
    %102 = vmatpush.bf16.msra.mxu0 0
    %103 = vmatpush.bf16.msra.mxu0 0
    %104 = vmatpush.bf16.msra.mxu0 0
    %105 = vmatpush.bf16.msra.mxu0 0
    %106 = vmatpush.bf16.msra.mxu0 %v90
    %107 = vmatpush.bf16.msra.mxu0 %v88
    %108 = vmatmul.bf16.gmra.mxu0 %v98
    %v109 = vpop.f32.mrf.mxu0
    %v110 = vadd.f32 %v72, %v109
    %v111 = vpop.f32.mrf.mxu0
    %112 = vdwg.mxu0
    %113 = vmatpush.bf16.msra.mxu0 0
    %114 = vmatpush.bf16.msra.mxu0 0
    %115 = vmatpush.bf16.msra.mxu0 0
    %116 = vmatpush.bf16.msra.mxu0 0
    %117 = vmatpush.bf16.msra.mxu0 0
    %118 = vmatpush.bf16.msra.mxu0 0
    %119 = vmatpush.bf16.msra.mxu0 %v91
    %120 = vmatpush.bf16.msra.mxu0 %v89
    %121 = vmatmul.bf16.gmra.mxu0 %v98
    %v122 = vpop.f32.mrf.mxu0
    %v123 = vadd.f32 %v73, %v122
    %v124 = vpop.f32.mrf.mxu0
    %125 = vdwg.mxu0
    %v126 = vmax.f32 %v110, 0.0
    %v127 = vmax.f32 %v123, 0.0
    %v128 = vpack.c.bf16 %v126, %v126
    %v129 = vpack.c.bf16 %v127, %v127
    %v130 = vld [vmem:[%s3] sm:$0xf]
    %v131 = vld [vmem:[%s3 + $0x4] sm:$0xf]
    %v132 = vld [vmem:[%s3 + $0x8] sm:$0xf]
    %v133 = vld [vmem:[%s3 + $0xc] sm:$0xf]
    %v134 = vld [vmem:[%s3 + $0x10] sm:$0xf]
    %v135 = vld [vmem:[%s3 + $0x14] sm:$0xf]
    %v136 = vld [vmem:[%s3 + $0x18] sm:$0xf]
    %v137 = vld [vmem:[%s3 + $0x1c] sm:$0xf]
    %v138 = vld [vmem:[%s3 + $0x20] sm:$0xf]
    %v139 = vld [vmem:[%s3 + $0x24] sm:$0xf]
    %v140 = vld [vmem:[%s3 + $0x28] sm:$0xf]
    %v141 = vld [vmem:[%s3 + $0x2c] sm:$0xf]
    %v142 = vld [vmem:[%s3 + $0x30] sm:$0xf]
    %v143 = vld [vmem:[%s3 + $0x34] sm:$0xf]
    %v144 = vld [vmem:[%s3 + $0x38] sm:$0xf]
    %v145 = vld [vmem:[%s3 + $0x3c] sm:$0xf]
    %v146 = vld [vmem:[%s3 + $0x40] sm:$0xf]
    %v147 = vld [vmem:[%s3 + $0x44] sm:$0xf]
    %v148 = vld [vmem:[%s3 + $0x48] sm:$0xf]
    %v149 = vld [vmem:[%s3 + $0x4c] sm:$0xf]
    %v150 = vld [vmem:[%s3 + $0x50] sm:$0xf]
    %v151 = vld [vmem:[%s3 + $0x54] sm:$0xf]
    %v152 = vld [vmem:[%s3 + $0x58] sm:$0xf]
    %v153 = vld [vmem:[%s3 + $0x5c] sm:$0xf]
    %v154 = vld [vmem:[%s3 + $0x60] sm:$0xf]
    %v155 = vld [vmem:[%s3 + $0x64] sm:$0xf]
    %v156 = vld [vmem:[%s3 + $0x68] sm:$0xf]
    %v157 = vld [vmem:[%s3 + $0x6c] sm:$0xf]
    %v158 = vld [vmem:[%s3 + $0x70] sm:$0xf]
    %v159 = vld [vmem:[%s3 + $0x74] sm:$0xf]
    %v160 = vld [vmem:[%s3 + $0x78] sm:$0xf]
    %v161 = vld [vmem:[%s3 + $0x7c] sm:$0xf]
    %v162 = vld [vmem:[%s4] sm:$0x1]
    %v164 = vperm.slane %v162, 0
    %v198 = vunpack.c.l.b16 %v130
    %v199 = vunpack.c.l.b16 %v131
    %v200 = vunpack.c.l.b16 %v132
    %v201 = vunpack.c.l.b16 %v133
    %v202 = vunpack.c.l.b16 %v134
    %v203 = vunpack.c.l.b16 %v135
    %v204 = vunpack.c.l.b16 %v136
    %v205 = vunpack.c.l.b16 %v137
    %v206 = vunpack.c.l.b16 %v138
    %v207 = vunpack.c.l.b16 %v139
    %v208 = vunpack.c.l.b16 %v140
    %v209 = vunpack.c.l.b16 %v141
    %v210 = vunpack.c.l.b16 %v142
    %v211 = vunpack.c.l.b16 %v143
    %v212 = vunpack.c.l.b16 %v144
    %v213 = vunpack.c.l.b16 %v145
    %v214 = vunpack.c.l.b16 %v146
    %v215 = vunpack.c.l.b16 %v147
    %v216 = vunpack.c.l.b16 %v148
    %v217 = vunpack.c.l.b16 %v149
    %v218 = vunpack.c.l.b16 %v150
    %v219 = vunpack.c.l.b16 %v151
    %v220 = vunpack.c.l.b16 %v152
    %v221 = vunpack.c.l.b16 %v153
    %v222 = vunpack.c.l.b16 %v154
    %v223 = vunpack.c.l.b16 %v155
    %v224 = vunpack.c.l.b16 %v156
    %v225 = vunpack.c.l.b16 %v157
    %v226 = vunpack.c.l.b16 %v158
    %v227 = vunpack.c.l.b16 %v159
    %v228 = vunpack.c.l.b16 %v160
    %v229 = vunpack.c.l.b16 %v161
    %v230 = vpack.c.b16 %v199, %v198
    %v231 = vpack.c.b16 %v201, %v200
    %v232 = vpack.c.b16 %v203, %v202
    %v233 = vpack.c.b16 %v205, %v204
    %v234 = vpack.c.b16 %v207, %v206
    %v235 = vpack.c.b16 %v209, %v208
    %v236 = vpack.c.b16 %v211, %v210
    %v237 = vpack.c.b16 %v213, %v212
    %v238 = vpack.c.b16 %v215, %v214
    %v239 = vpack.c.b16 %v217, %v216
    %v240 = vpack.c.b16 %v219, %v218
    %v241 = vpack.c.b16 %v221, %v220
    %v242 = vpack.c.b16 %v223, %v222
    %v243 = vpack.c.b16 %v225, %v224
    %v244 = vpack.c.b16 %v227, %v226
    %v245 = vpack.c.b16 %v229, %v228
    %262 = vmatpush.bf16.msra.mxu0 %v237
    %263 = vmatpush.bf16.msra.mxu0 %v236
    %264 = vmatpush.bf16.msra.mxu0 %v235
    %265 = vmatpush.bf16.msra.mxu0 %v234
    %266 = vmatpush.bf16.msra.mxu0 %v233
    %267 = vmatpush.bf16.msra.mxu0 %v232
    %268 = vmatpush.bf16.msra.mxu0 %v231
    %269 = vmatpush.bf16.msra.mxu0 %v230
    %270 = vmatmul.bf16.gmra.mxu0 %v128
    %v271 = vpop.f32.mrf.mxu0
    %v272 = vadd.f32 %v164, %v271
    %v273 = vpop.f32.mrf.mxu0
    %274 = vdwg.mxu0
    %275 = vmatpush.bf16.msra.mxu0 %v245
    %276 = vmatpush.bf16.msra.mxu0 %v244
    %277 = vmatpush.bf16.msra.mxu0 %v243
    %278 = vmatpush.bf16.msra.mxu0 %v242
    %279 = vmatpush.bf16.msra.mxu0 %v241
    %280 = vmatpush.bf16.msra.mxu0 %v240
    %281 = vmatpush.bf16.msra.mxu0 %v239
    %282 = vmatpush.bf16.msra.mxu0 %v238
    %283 = vmatmul.bf16.gmra.mxu0 %v129
    %v284 = vpop.f32.mrf.mxu0
    %v285 = vadd.f32 %v272, %v284
    %v286 = vpop.f32.mrf.mxu0
    %287 = vdwg.mxu0
    %v288 = vmax.f32 %v285, 0.0
    %v289 = vpack.c.bf16 %v288, %v288
    %v290 = vld [vmem:[%s5] sm:$0xf]
    %v291 = vld [vmem:[%s5 + $0x4] sm:$0xf]
    %v292 = vld [vmem:[%s5 + $0x8] sm:$0xf]
    %v293 = vld [vmem:[%s5 + $0xc] sm:$0xf]
    %v294 = vld [vmem:[%s5 + $0x10] sm:$0xf]
    %v295 = vld [vmem:[%s5 + $0x14] sm:$0xf]
    %v296 = vld [vmem:[%s5 + $0x18] sm:$0xf]
    %v297 = vld [vmem:[%s5 + $0x1c] sm:$0xf]
    %v298 = vld [vmem:[%s5 + $0x20] sm:$0xf]
    %v299 = vld [vmem:[%s5 + $0x24] sm:$0xf]
    %v300 = vld [vmem:[%s5 + $0x28] sm:$0xf]
    %v301 = vld [vmem:[%s5 + $0x2c] sm:$0xf]
    %v302 = vld [vmem:[%s5 + $0x30] sm:$0xf]
    %v303 = vld [vmem:[%s5 + $0x34] sm:$0xf]
    %v304 = vld [vmem:[%s5 + $0x38] sm:$0xf]
    %v305 = vld [vmem:[%s5 + $0x3c] sm:$0xf]
    %v306 = vld [vmem:[%s6] sm:$0x1]
    %v308 = vperm.slane %v306, 0
    %v326 = vunpack.c.l.b16 %v290
    %v327 = vunpack.c.l.b16 %v291
    %v328 = vunpack.c.l.b16 %v292
    %v329 = vunpack.c.l.b16 %v293
    %v330 = vunpack.c.l.b16 %v294
    %v331 = vunpack.c.l.b16 %v295
    %v332 = vunpack.c.l.b16 %v296
    %v333 = vunpack.c.l.b16 %v297
    %v334 = vunpack.c.l.b16 %v298
    %v335 = vunpack.c.l.b16 %v299
    %v336 = vunpack.c.l.b16 %v300
    %v337 = vunpack.c.l.b16 %v301
    %v338 = vunpack.c.l.b16 %v302
    %v339 = vunpack.c.l.b16 %v303
    %v340 = vunpack.c.l.b16 %v304
    %v341 = vunpack.c.l.b16 %v305
    %v342 = vpack.c.b16 %v327, %v326
    %v343 = vpack.c.b16 %v329, %v328
    %v344 = vpack.c.b16 %v331, %v330
    %v345 = vpack.c.b16 %v333, %v332
    %v346 = vpack.c.b16 %v335, %v334
    %v347 = vpack.c.b16 %v337, %v336
    %v348 = vpack.c.b16 %v339, %v338
    %v349 = vpack.c.b16 %v341, %v340
    %358 = vmatpush.bf16.msra.mxu0 %v349
    %359 = vmatpush.bf16.msra.mxu0 %v348
    %360 = vmatpush.bf16.msra.mxu0 %v347
    %361 = vmatpush.bf16.msra.mxu0 %v346
    %362 = vmatpush.bf16.msra.mxu0 %v345
    %363 = vmatpush.bf16.msra.mxu0 %v344
    %364 = vmatpush.bf16.msra.mxu0 %v343
    %365 = vmatpush.bf16.msra.mxu0 %v342
    %366 = vmatmul.bf16.gmra.mxu0 %v289
    %v367 = vpop.f32.mrf.mxu0
    %v368 = vadd.f32 %v308, %v367
    %v369 = vpop.f32.mrf.mxu0
    %370 = vdwg.mxu0
    %v371 = vmax.f32 %v368, 0.0
    %v372 = vpack.c.bf16 %v371, %v371
    %v373 = vld [vmem:[%s7] sm:$0xf]
    %v374 = vld [vmem:[%s7 + $0x4] sm:$0xf]
    %v375 = vld [vmem:[%s7 + $0x8] sm:$0xf]
    %v376 = vld [vmem:[%s7 + $0xc] sm:$0xf]
    %v377 = vld [vmem:[%s7 + $0x10] sm:$0xf]
    %v378 = vld [vmem:[%s7 + $0x14] sm:$0xf]
    %v379 = vld [vmem:[%s7 + $0x18] sm:$0xf]
    %v380 = vld [vmem:[%s7 + $0x1c] sm:$0xf]
    %v381 = vld [vmem:[%s8] sm:$0x1]
    %v383 = vperm.slane %v381, 0
    %v393 = vunpack.c.l.b16 %v373
    %v394 = vunpack.c.l.b16 %v374
    %v395 = vunpack.c.l.b16 %v375
    %v396 = vunpack.c.l.b16 %v376
    %v397 = vunpack.c.l.b16 %v377
    %v398 = vunpack.c.l.b16 %v378
    %v399 = vunpack.c.l.b16 %v379
    %v400 = vunpack.c.l.b16 %v380
    %v401 = vpack.c.b16 %v394, %v393
    %v402 = vpack.c.b16 %v396, %v395
    %v403 = vpack.c.b16 %v398, %v397
    %v404 = vpack.c.b16 %v400, %v399
    %vm409 = vcmask 523264
    %v411 = vsel %vm409, %v372, 0
    %413 = vmatpush.bf16.msra.mxu0 0
    %414 = vmatpush.bf16.msra.mxu0 0
    %415 = vmatpush.bf16.msra.mxu0 0
    %416 = vmatpush.bf16.msra.mxu0 0
    %417 = vmatpush.bf16.msra.mxu0 %v404
    %418 = vmatpush.bf16.msra.mxu0 %v403
    %419 = vmatpush.bf16.msra.mxu0 %v402
    %420 = vmatpush.bf16.msra.mxu0 %v401
    %421 = vmatmul.bf16.gmra.mxu0 %v411
    %v422 = vpop.f32.mrf.mxu0
    %v423 = vadd.f32 %v383, %v422
    %v424 = vpop.f32.mrf.mxu0
    %425 = vdwg.mxu0
    %vm426 = vcmask 64512
    %427 = vst.msk [vmem:[#allocation7] sm:$0xff] %vm426, %v423
    // Predicated region
    $region46: #{tpu_custom_call.1} parent=1 // pred_check
      _
    $region47: #{tpu_custom_call.1} parent=1 // pred_check_branch
      %429 = sbr.rel (0) target = $region49
    $region48: #{tpu_custom_call.1} parent=1 // pred_region
      %431 = vsyncadd [#allocation4], 0
      %s433 = sshll.u32 [#allocation7], 4
      %s434 = int_to_ptr.vmem [resolvable:$true] %s433
      %s435 = sshll.u32 %s9, 4
      %s436 = int_to_ptr.hbm [resolvable:$true] %s435
      %438 = dma.vmem_to_hbm [thread:$0]  %s434, 128, %s436, [#allocation4]
    $region49: #{tpu_custom_call.1} parent=1 // pred_fallthru
      _
    // Predicated region
    $region50: #{tpu_custom_call.1} parent=1 // pred_check
      _
    $region51: #{tpu_custom_call.1} parent=1 // pred_check_branch
      %440 = sbr.rel (0) target = $region53
    $region52: #{tpu_custom_call.1} parent=1 // pred_region
      %442 = dma.done [#allocation4], 128
    $region53: #{tpu_custom_call.1} parent=1 // pred_fallthru
      _
    %443 = vsyncpa [#allocation3], 1
    %444 = vsyncpa [#allocation6], 1
    %445 = vsyncpa [#allocation4], 1

</llo_original>
